<compile_context>
chip_gen: v6e
topology: v6e:2x2x1
jax: 0.10.0
libtpu: 0.0.40
codegen_flags: <defaults>
</compile_context>

<pallas_src>
import functools

import jax
import jax.numpy as jnp
from jax.experimental import pallas as pl
from jax.experimental.pallas import tpu as pltpu


def _srm_kernel(p_ref, x_ref, o_ref, *, hw):
    # p_ref: (block_n, 8) packed [a, b, c, 0...];  x_ref/o_ref: (block_n, hw).
    # The block's last dim is the full HW, so every lane holds valid data and
    # no lane mask is needed for the reductions.
    x = x_ref[...].astype(jnp.float32)
    p = p_ref[...]
    a = p[:, 0:1]
    bcoef = p[:, 1:2]
    ccoef = p[:, 2:3]

    # Single-pass reduction: sum and sum-of-squares, f32 accumulation.
    s1 = jnp.sum(x, axis=-1, keepdims=True)
    s2 = jnp.sum(x * x, axis=-1, keepdims=True)
    mean = s1 * (1.0 / hw)
    # torch .std() is unbiased -> /(hw - 1), clamped for hw == 1.  The max()
    # guards against cancellation pushing the variance slightly negative.
    var = jnp.maximum(s2 - s1 * mean, 0.0) * (1.0 / max(hw - 1, 1))
    std = jnp.sqrt(var)

    # Folded grouped-conv1d + BatchNorm (inference) + sigmoid gate.
    g = jax.nn.sigmoid(a * mean + bcoef * std + ccoef)        # (block_n, 1)
    o_ref[...] = (x * g).astype(o_ref.dtype)


def _choose_block_n(n, hw, itemsize):
    """Pick the row-block size (multiple of the sublane granularity).

    Targets ~4 MiB per x tile (DMA-efficiency knee), then shapes the grid so
    the step count is even (v7x's two TensorCores split a 'parallel' axis) and,
    when there is enough work, >= 8 steps (>= 4 per core) for pipeline
    steady state.
    """
    # Sublane granularity of the row axis: 8 for 32-bit, 16 for 16-bit,
    # 32 for 8-bit dtypes (packed sublanes).
    sub = max(8, 32 // max(itemsize, 1))
    row_bytes = max(hw * itemsize, 1)
    tile_budget = 4 << 20                            # ~4 MiB x tile
    g = -(-n // sub)                                 # total row groups
    k_cap = max(1, min(g, tile_budget // (row_bytes * sub)))
    want_steps = min(8, g)
    best_k, best_score = k_cap, None
    for k in range(k_cap, 0, -1):
        steps = -(-g // k)
        score = (steps == 1 or steps % 2 == 0,       # even split across 2 TCs
                 steps >= want_steps,                # enough steps to pipeline
                 k)                                  # then: largest tile
        if best_score is None or score > best_score:
            best_k, best_score = k, score
    return best_k * sub


def srm_layer(x, cfc_weight, bn_gamma, bn_beta, bn_rmean, bn_rvar, eps=1e-5):
    """x: (B, C, H, W).  cfc_weight: (C, 1, 2).  bn_*: (C,)."""
    b, c, h, w = x.shape
    n = b * c
    hw = h * w
    itemsize = jnp.dtype(x.dtype).itemsize

    block_n = _choose_block_n(n, hw, itemsize)
    grid = (pl.cdiv(n, block_n),)

    # ---- fold Conv1d (2-tap, grouped) + BatchNorm1d (inference) per channel ----
    inv = jax.lax.rsqrt(bn_rvar.astype(jnp.float32) + eps)
    scale = bn_gamma.astype(jnp.float32) * inv
    a_c = cfc_weight[:, 0, 0].astype(jnp.float32) * scale
    b_c = cfc_weight[:, 0, 1].astype(jnp.float32) * scale
    c_c = bn_beta.astype(jnp.float32) - bn_rmean.astype(jnp.float32) * scale
    params_c = jnp.stack([a_c, b_c, c_c], axis=-1)                   # (C, 3)
    params = jnp.zeros((n, 8), jnp.float32).at[:, :3].set(
        jnp.broadcast_to(params_c[None], (b, c, 3)).reshape(n, 3))   # (N, 8)

    x2d = x.reshape(n, hw)   # metadata-only reshape, no extra HBM pass

    row_spec = pl.BlockSpec((block_n, hw), lambda i: (i, 0))
    par_spec = pl.BlockSpec((block_n, 8), lambda i: (i, 0))

    # VMEM accounting: double-buffered x-in + out tiles (lane dim padded to a
    # multiple of 128 in VMEM) plus the double-buffered, lane-padded
    # (block_n, 128) f32 param blocks, with a small margin.  Capped well under
    # v7x's 64 MiB physical VMEM.
    hw_lanes = -(-hw // 128) * 128
    x_tile_vmem = block_n * hw_lanes * itemsize
    par_tile_vmem = block_n * 128 * 4
    vmem_needed = 4 * x_tile_vmem + 2 * par_tile_vmem
    vmem_limit = int(min(max(vmem_needed + (2 << 20), 16 << 20), 60 << 20))

    out = pl.pallas_call(
        functools.partial(_srm_kernel, hw=hw),
        out_shape=jax.ShapeDtypeStruct((n, hw), x.dtype),
        grid_spec=pltpu.PrefetchScalarGridSpec(
            num_scalar_prefetch=0,
            grid=grid,
            in_specs=[par_spec, row_spec],
            out_specs=row_spec,
        ),
        compiler_params=pltpu.CompilerParams(
            dimension_semantics=("parallel",),
            vmem_limit_bytes=vmem_limit),
    )(params, x2d)

    return out.reshape(b, c, h, w)


def srm_reference(x, cfc_weight, bn_gamma, bn_beta, bn_rmean, bn_rvar, eps=1e-5):
    b, c, h, w = x.shape
    xf = x.reshape(b, c, -1).astype(jnp.float32)
    mean = xf.mean(-1)
    std = jnp.sqrt(((xf - mean[..., None]) ** 2).sum(-1) / max(h * w - 1, 1))
    z = cfc_weight[:, 0, 0][None, :] * mean + cfc_weight[:, 0, 1][None, :] * std
    z = (z - bn_rmean[None, :]) / jnp.sqrt(bn_rvar[None, :] + eps)
    z = z * bn_gamma[None, :] + bn_beta[None, :]
    g = jax.nn.sigmoid(z)
    return x.astype(jnp.float32) * g[:, :, None, None]


def _run_case(key, B, C, H, W, dtype=jnp.float32):
    kx, kw, kg, kb, km, kv = jax.random.split(key, 6)
    x = jax.random.normal(kx, (B, C, H, W), dtype=jnp.float32).astype(dtype)
    # Conv1d(channel, channel, kernel_size=2, groups=channel, bias=False)
    cfc_weight = jax.random.normal(kw, (C, 1, 2), dtype=jnp.float32) * 0.5
    # BatchNorm1d(channel) parameters (inference semantics).
    bn_gamma = 1.0 + 0.1 * jax.random.normal(kg, (C,), dtype=jnp.float32)
    bn_beta = 0.1 * jax.random.normal(kb, (C,), dtype=jnp.float32)
    bn_rmean = 0.1 * jax.random.normal(km, (C,), dtype=jnp.float32)
    bn_rvar = 1.0 + 0.1 * jax.nn.softplus(
        jax.random.normal(kv, (C,), dtype=jnp.float32))

    y = srm_layer(x, cfc_weight, bn_gamma, bn_beta, bn_rmean, bn_rvar)
    y = jax.block_until_ready(y)
    assert y.shape == (B, C, H, W) and y.dtype == jnp.dtype(dtype)

    y_ref = srm_reference(x, cfc_weight, bn_gamma, bn_beta, bn_rmean, bn_rvar)
    tol = 1e-5 if dtype == jnp.float32 else 3e-2
    assert jnp.allclose(y.astype(jnp.float32), y_ref, atol=tol, rtol=tol), \
        f"mismatch vs reference (dtype={jnp.dtype(dtype)})"


if __name__ == "__main__":
    key = jax.random.PRNGKey(0)
    k1, k2, k3 = jax.random.split(key, 3)

    # Clean case: HW multiple of 128, N multiple of 8.
    _run_case(k1, B=2, C=4, H=16, W=16)
    # Ragged case: HW = 49 (full-array lane block, no padding), N = 15
    # (grid handles the OOB row tail).
    _run_case(k2, B=3, C=5, H=7, W=7)
    # bf16 I/O: halves HBM bytes on this bandwidth-bound kernel; stats in f32.
    _run_case(k3, B=2, C=6, H=11, W=11, dtype=jnp.bfloat16)

    print("KERNEL_OK")
</pallas_src>

<mosaic_0001>
module attributes {stable_mosaic.version = 11 : i64} {
  func.func @_srm_kernel(%arg0: i32, %arg1: memref<8x8xf32, #tpu.memory_space<vmem>>, %arg2: memref<8x256xf32, #tpu.memory_space<vmem>>, %arg3: memref<8x256xf32, #tpu.memory_space<vmem>>) attributes {dimension_semantics = [#tpu.dimension_semantics<parallel>], iteration_bounds = array<i64: 1>, scalar_prefetch = 0 : i64, scratch_operands = 0 : i64, tpu.core_type = #tpu.core_type<tc>, window_params = [{transform_indices = @transform_0, window_bounds = array<i64: 8, 8>}, {transform_indices = @transform_1, window_bounds = array<i64: 8, 256>}, {transform_indices = @transform_2, window_bounds = array<i64: 8, 256>}]} {
    %c0 = arith.constant 0 : index
    %c0_0 = arith.constant 0 : index
    %0 = vector.load %arg2[%c0, %c0_0] : memref<8x256xf32, #tpu.memory_space<vmem>>, vector<8x256xf32>
    %c0_1 = arith.constant 0 : index
    %c0_2 = arith.constant 0 : index
    %1 = vector.load %arg1[%c0_1, %c0_2] : memref<8x8xf32, #tpu.memory_space<vmem>>, vector<8x8xf32>
    %2 = vector.extract_strided_slice %1 {offsets = [0, 0], sizes = [8, 1], strides = [1, 1]} : vector<8x8xf32> to vector<8x1xf32>
    %3 = vector.extract_strided_slice %1 {offsets = [0, 1], sizes = [8, 1], strides = [1, 1]} : vector<8x8xf32> to vector<8x1xf32>
    %4 = vector.extract_strided_slice %1 {offsets = [0, 2], sizes = [8, 1], strides = [1, 1]} : vector<8x8xf32> to vector<8x1xf32>
    %cst = arith.constant dense<0.000000e+00> : vector<8xf32>
    %5 = vector.multi_reduction <add>, %0, %cst [1] : vector<8x256xf32> to vector<8xf32>
    %6 = vector.shape_cast %5 : vector<8xf32> to vector<8x1xf32>
    %7 = arith.mulf %0, %0 : vector<8x256xf32>
    %cst_3 = arith.constant dense<0.000000e+00> : vector<8xf32>
    %8 = vector.multi_reduction <add>, %7, %cst_3 [1] : vector<8x256xf32> to vector<8xf32>
    %9 = vector.shape_cast %8 : vector<8xf32> to vector<8x1xf32>
    %cst_4 = arith.constant 3.906250e-03 : f32
    %10 = vector.broadcast %cst_4 : f32 to vector<8x1xf32>
    %11 = arith.mulf %6, %10 : vector<8x1xf32>
    %12 = arith.mulf %6, %11 : vector<8x1xf32>
    %13 = arith.subf %9, %12 : vector<8x1xf32>
    %cst_5 = arith.constant 0.000000e+00 : f32
    %14 = vector.broadcast %cst_5 : f32 to vector<8x1xf32>
    %15 = arith.maximumf %13, %14 : vector<8x1xf32>
    %cst_6 = arith.constant 0.00392156886 : f32
    %16 = vector.broadcast %cst_6 : f32 to vector<8x1xf32>
    %17 = arith.mulf %15, %16 : vector<8x1xf32>
    %18 = math.sqrt %17 : vector<8x1xf32>
    %19 = arith.mulf %2, %11 : vector<8x1xf32>
    %20 = arith.mulf %3, %18 : vector<8x1xf32>
    %21 = arith.addf %19, %20 : vector<8x1xf32>
    %22 = arith.addf %21, %4 : vector<8x1xf32>
    %23 = arith.negf %22 : vector<8x1xf32>
    %24 = math.exp %23 : vector<8x1xf32>
    %cst_7 = arith.constant 1.000000e+00 : f32
    %25 = vector.broadcast %cst_7 : f32 to vector<8x1xf32>
    %26 = arith.addf %25, %24 : vector<8x1xf32>
    %27 = arith.divf %25, %26 : vector<8x1xf32>
    %28 = vector.broadcast %27 : vector<8x1xf32> to vector<8x256xf32>
    %29 = arith.mulf %0, %28 : vector<8x256xf32>
    %c0_8 = arith.constant 0 : index
    %c0_9 = arith.constant 0 : index
    %30 = vector.load %arg3[%c0_8, %c0_9] : memref<8x256xf32, #tpu.memory_space<vmem>>, vector<8x256xf32>
    tpu.vector_store %arg3[%c0_8, %c0_9], %29 {strides = array<i32>} : memref<8x256xf32, #tpu.memory_space<vmem>>, vector<8x256xf32>,
    return
  }
  func.func @transform_0(%arg0: i32) -> (i32, i32) {
    %c0_i32 = arith.constant 0 : i32
    %c0_i32_0 = arith.constant 0 : i32
    return %arg0, %c0_i32 : i32, i32
  }
  func.func @transform_1(%arg0: i32) -> (i32, i32) {
    %c0_i32 = arith.constant 0 : i32
    %c0_i32_0 = arith.constant 0 : i32
    return %arg0, %c0_i32 : i32, i32
  }
  func.func @transform_2(%arg0: i32) -> (i32, i32) {
    %c0_i32 = arith.constant 0 : i32
    %c0_i32_0 = arith.constant 0 : i32
    return %arg0, %c0_i32 : i32, i32
  }
}

</mosaic_0001>

<llo_original>
// kernel: tpu_custom_call.1
$region0: #{tpu_custom_call.1}
  #allocation0 [shape = 'u32[]', space=smem, size = 0x4, offset = 0x4, fixed_abs, tag = 'smem constant byte address 0x4 - core index']
  #allocation1 [shape = 'u32[144,128]{1,0:T(1,128)}', space=vmem, size = 0x12000, scoped, tag = 'internal scratch']
  %s0 = inlined_call_operand.hbm [shape: f32[8,8], index: 0, kind: input, shape index: {}]
  %s1 = inlined_call_operand.hbm [shape: f32[8,256], index: 1, kind: input, shape index: {}]
  %s2 = inlined_call_operand.hbm [shape: f32[8,256], index: 2, kind: output, shape index: {}]
  %s3 = sld [smem:[#allocation0]]
  $region26: #{tpu_custom_call.1} parent=0
    _
  %s5 = ssub.s32 1, %s3
  %s6 = scalar_select 0, %s5, %s3
  $region1: #{tpu_custom_call.1} parent=0
    #allocation2 [shape = 'u8[4096]{0}', space=vmem, size = 0x1000, scoped, tag = 'input window, operand 0, single buffered']
    #allocation3 [shape = 's32[1]{0}', space=sflag, size = 0x4, scoped, tag = 'scoped memory for tpu_custom_call.1']
    #allocation4 [shape = 's32[1]{0}', space=sflag, size = 0x4, scoped, tag = 'scoped memory for tpu_custom_call.1']
    #allocation5 [shape = 'u8[8192]{0}', space=vmem, size = 0x2000, scoped, tag = 'input window, operand 1, single buffered']
    #allocation6 [shape = 's32[1]{0}', space=sflag, size = 0x4, scoped, tag = 'scoped memory for tpu_custom_call.1']
    #allocation7 [shape = 'u8[8192]{0}', space=vmem, size = 0x2000, scoped, tag = 'output window, operand 0, single buffered']
    %7 = vsyncpa [#allocation3], 0
    %8 = vsyncpa [#allocation6], 0
    %9 = vsyncpa [#allocation4], 0
    // Predicated region
    $region2: #{tpu_custom_call.1} parent=1 // pred_check
      _
    $region3: #{tpu_custom_call.1} parent=1 // pred_check_branch
      %11 = sbr.rel (0) target = $region5
    $region4: #{tpu_custom_call.1} parent=1 // pred_region
      %s13 = ssub.s32 128, 128
      %14 = vsyncadd [#allocation3], %s13
      %s16 = sshll.u32 [#allocation2], 4
      %s17 = int_to_ptr.vmem [resolvable:$true] %s16
      %19 = dma.hbm_to_vmem [thread:$0]  %s0, 128, %s17, [#allocation3]
    $region5: #{tpu_custom_call.1} parent=1 // pred_fallthru
      _
    // Predicated region
    $region6: #{tpu_custom_call.1} parent=1 // pred_check
      _
    $region7: #{tpu_custom_call.1} parent=1 // pred_check_branch
      %21 = sbr.rel (0) target = $region9
    $region8: #{tpu_custom_call.1} parent=1 // pred_region
      %s23 = ssub.s32 256, 256
      %24 = vsyncadd [#allocation6], %s23
      %s26 = sshll.u32 [#allocation5], 4
      %s27 = int_to_ptr.vmem [resolvable:$true] %s26
      %29 = dma.hbm_to_vmem [thread:$0]  %s1, 256, %s27, [#allocation6]
    $region9: #{tpu_custom_call.1} parent=1 // pred_fallthru
      _
    // Predicated region
    $region10: #{tpu_custom_call.1} parent=1 // pred_check
      _
    $region11: #{tpu_custom_call.1} parent=1 // pred_check_branch
      %31 = sbr.rel (0) target = $region13
    $region12: #{tpu_custom_call.1} parent=1 // pred_region
      %32 = dma.done [#allocation3], 128
    $region13: #{tpu_custom_call.1} parent=1 // pred_fallthru
      _
    // Predicated region
    $region14: #{tpu_custom_call.1} parent=1 // pred_check
      _
    $region15: #{tpu_custom_call.1} parent=1 // pred_check_branch
      %34 = sbr.rel (0) target = $region17
    $region16: #{tpu_custom_call.1} parent=1 // pred_region
      %35 = dma.done [#allocation6], 256
    $region17: #{tpu_custom_call.1} parent=1 // pred_fallthru
      _
    %v36 = vld [vmem:[#allocation5] sm:$0xff]
    %v37 = vld [vmem:[#allocation5 + $0x8] sm:$0xff]
    %v38 = vld [vmem:[#allocation2] sm:$0xff]
    %v39 = vadd.f32 %v36, %v37
    %40 = vadd.xlane.f32.xlu0 %v39
    %v41 = vpop.xlane.xlu0 %40
    %v42 = vmul.f32 %v36, %v36
    %v43 = vmul.f32 %v37, %v37
    %v44 = vadd.f32 %v42, %v43
    %45 = vadd.xlane.f32.xlu0 %v44
    %v46 = vpop.xlane.xlu0 %45
    %v47 = vmul.f32 %v41, 0.00390625
    %v48 = vmul.f32 %v41, %v47
    %v49 = vsub.f32 %v46, %v48
    %v50 = vmax.f32 %v49, 0.0
    %v51 = vmul.f32 %v50, 0.003921569
    %v52 = vrsqrt.pop %v51
    %v53 = vmul.f32 %v51, %v52
    %vm54 = vcmp.eq.f32.partialorder %v51, inf
    %v55 = vsel %vm54, %v51, %v53
    %vm56 = vcmp.eq.f32.partialorder %v51, 0.0
    %v57 = vand.u32 %v51, 2147483648
    %v58 = vsel %vm56, %v57, %v55
    %v59 = vmul.f32 %v38, %v47
    %v60 = vmul.f32 %v38, %v58
    %62 = vrot.lane.b32.xlu0 %v60, 127
    %v63 = vpop.permute.xlu0 %62
    %v65 = vadd.f32 %v59, %v63
    %67 = vrot.lane.b32.xlu0 %v38, 126
    %v68 = vpop.permute.xlu0 %67
    %v70 = vadd.f32 %v65, %v68
    %v71 = vxor.u32 %v70, 2147483648
    %v72 = vmul.f32 %v71, 1.442695
    %v73 = vpow.pop %v72
    %v74 = vadd.f32 %v73, 1.0
    %v75 = vrcp.pop %v74
    %v76 = vmul.f32 1.0, %v75
    %78 = vset.pattern.permute.xlu0 0
    %79 = vperm.xlu0 %78, %v76
    %v80 = vpop.permute.xlu0 %79
    %v82 = vmul.f32 %v36, %v80
    %v83 = vmul.f32 %v37, %v80
    %84 = vst [vmem:[#allocation7] sm:$0xff] %v82
    %85 = vst [vmem:[#allocation7 + $0x8] sm:$0xff] %v83
    // Predicated region
    $region18: #{tpu_custom_call.1} parent=1 // pred_check
      _
    $region19: #{tpu_custom_call.1} parent=1 // pred_check_branch
      %87 = sbr.rel (0) target = $region21
    $region20: #{tpu_custom_call.1} parent=1 // pred_region
      %s89 = ssub.s32 256, 256
      %90 = vsyncadd [#allocation4], %s89
      %s92 = sshll.u32 [#allocation7], 4
      %s93 = int_to_ptr.vmem [resolvable:$true] %s92
      %95 = dma.vmem_to_hbm [thread:$0]  %s93, 256, %s2, [#allocation4]
    $region21: #{tpu_custom_call.1} parent=1 // pred_fallthru
      _
    // Predicated region
    $region22: #{tpu_custom_call.1} parent=1 // pred_check
      _
    $region23: #{tpu_custom_call.1} parent=1 // pred_check_branch
      %97 = sbr.rel (0) target = $region25
    $region24: #{tpu_custom_call.1} parent=1 // pred_region
      %98 = dma.done [#allocation4], 256
    $region25: #{tpu_custom_call.1} parent=1 // pred_fallthru
      _
    %99 = vsyncpa [#allocation3], 1
    %100 = vsyncpa [#allocation6], 1
    %101 = vsyncpa [#allocation4], 1

</llo_original>
